<compile_context>
chip_gen: v7x
topology: tpu7x:2x2x1
jax: 0.10.0
libtpu: 0.0.40
codegen_flags: <defaults>
</compile_context>

<pallas_src>
import jax
import jax.numpy as jnp
from jax.experimental import pallas as pl
from jax.experimental.pallas import tpu as pltpu


def _silu_kernel(x_ref, o_ref):
    # SiLU = x * sigmoid(x); sigmoid(x) = 0.5*(1 + tanh(0.5*x))  -> one EUP op.
    x = x_ref[...].astype(jnp.float32)
    y = 0.5 * x * (1.0 + jnp.tanh(0.5 * x))
    o_ref[...] = y.astype(o_ref.dtype)


def pallas_silu(x: jax.Array) -> jax.Array:
    """Elementwise SiLU via a tiled, lane-dense Pallas TPU kernel."""
    orig_shape = x.shape
    n = x.size
    flat = x.reshape(-1)

    # Choose a lane width: largest of these that divides the element count,
    # so we avoid an extra pad/copy in the common case.
    lane = None
    for cand in (1024, 512, 256, 128):
        if n % cand == 0:
            lane = cand
            break
    if lane is None:
        lane = 512
        pad = (-n) % lane
        flat = jnp.pad(flat, (0, pad))
    rows = flat.shape[0] // lane
    x2d = flat.reshape(rows, lane)

    # ~2 MiB blocks: with 1 input + 1 output, double-buffered -> ~8 MiB live,
    # comfortably inside v7x's 64 MiB physical / 32 MiB scoped VMEM.
    bytes_per_elem = x.dtype.itemsize
    target_block_bytes = 2 * 1024 * 1024
    tile_r = max(8, target_block_bytes // (lane * bytes_per_elem))
    if tile_r >= rows:
        tile_r = rows          # full-extent block (always layout-legal)
        grid_r = 1
    else:
        tile_r = (tile_r // 8) * 8          # keep sublane-aligned
        grid_r = pl.cdiv(rows, tile_r)      # partial edge block is masked

    out2d = pl.pallas_call(
        _silu_kernel,
        out_shape=jax.ShapeDtypeStruct(x2d.shape, x.dtype),
        grid=(grid_r,),
        in_specs=[pl.BlockSpec((tile_r, lane), lambda i: (i, 0))],
        out_specs=pl.BlockSpec((tile_r, lane), lambda i: (i, 0)),
        compiler_params=pltpu.CompilerParams(
            dimension_semantics=("parallel",),
            vmem_limit_bytes=32 * 1024 * 1024,
        ),
    )(x2d)

    out_flat = out2d.reshape(-1)
    if out_flat.shape[0] != n:
        out_flat = out_flat[:n]
    return out_flat.reshape(orig_shape)


class LambdaModule:
    """JAX/Pallas equivalent of the PyTorch LambdaModule: forward == function(*args)."""

    def __init__(self, function):
        self.function = function

    def __call__(self, *args):
        return self.function(*args)


if __name__ == "__main__":
    key = jax.random.PRNGKey(0)
    x = jax.random.normal(key, (2, 4, 16, 16), dtype=jnp.float32)

    module = LambdaModule(pallas_silu)
    out = module(x)
    out = jax.block_until_ready(out)

    # Reference check against plain-JAX SiLU (tanh-form sigmoid is within f32
    # EUP accuracy of the exact logistic).
    ref = x * jax.nn.sigmoid(x)
    assert out.shape == x.shape and out.dtype == x.dtype
    assert jnp.max(jnp.abs(out - ref)) < 1e-4

    print("KERNEL_OK")
</pallas_src>

<mosaic_0001>
module attributes {stable_mosaic.version = 11 : i64} {
  func.func @_silu_kernel(%arg0: i32, %arg1: memref<2x1024xf32, #tpu.memory_space<vmem>>, %arg2: memref<2x1024xf32, #tpu.memory_space<vmem>>) attributes {dimension_semantics = [#tpu.dimension_semantics<parallel>], iteration_bounds = array<i64: 1>, scalar_prefetch = 0 : i64, scratch_operands = 0 : i64, tpu.core_type = #tpu.core_type<tc>, window_params = [{transform_indices = @transform_0, window_bounds = array<i64: 2, 1024>}, {transform_indices = @transform_1, window_bounds = array<i64: 2, 1024>}]} {
    %c0 = arith.constant 0 : index
    %c0_0 = arith.constant 0 : index
    %0 = vector.load %arg1[%c0, %c0_0] : memref<2x1024xf32, #tpu.memory_space<vmem>>, vector<2x1024xf32>
    %cst = arith.constant 5.000000e-01 : f32
    %1 = vector.broadcast %cst : f32 to vector<2x1024xf32>
    %2 = arith.mulf %1, %0 : vector<2x1024xf32>
    %cst_1 = arith.constant 5.000000e-01 : f32
    %3 = vector.broadcast %cst_1 : f32 to vector<2x1024xf32>
    %4 = arith.mulf %3, %0 : vector<2x1024xf32>
    %5 = math.tanh %4 : vector<2x1024xf32>
    %cst_2 = arith.constant 1.000000e+00 : f32
    %6 = vector.broadcast %cst_2 : f32 to vector<2x1024xf32>
    %7 = arith.addf %6, %5 : vector<2x1024xf32>
    %8 = arith.mulf %2, %7 : vector<2x1024xf32>
    %c0_3 = arith.constant 0 : index
    %c0_4 = arith.constant 0 : index
    %9 = vector.load %arg2[%c0_3, %c0_4] : memref<2x1024xf32, #tpu.memory_space<vmem>>, vector<2x1024xf32>
    tpu.vector_store %arg2[%c0_3, %c0_4], %8 {strides = array<i32>} : memref<2x1024xf32, #tpu.memory_space<vmem>>, vector<2x1024xf32>,
    return
  }
  func.func @transform_0(%arg0: i32) -> (i32, i32) {
    %c0_i32 = arith.constant 0 : i32
    %c0_i32_0 = arith.constant 0 : i32
    return %arg0, %c0_i32 : i32, i32
  }
  func.func @transform_1(%arg0: i32) -> (i32, i32) {
    %c0_i32 = arith.constant 0 : i32
    %c0_i32_0 = arith.constant 0 : i32
    return %arg0, %c0_i32 : i32, i32
  }
}

</mosaic_0001>

<llo_original>
// kernel: tpu_custom_call.1
$region0: #{tpu_custom_call.1}
  #allocation0 [shape = 'u32[]', space=smem, size = 0x4, offset = 0x4, fixed_abs, tag = 'smem constant byte address 0x4 - core index']
  #allocation1 [shape = 'u32[144,128]{1,0:T(1,128)}', space=vmem, size = 0x12000, scoped, tag = 'internal scratch']
  %s0 = inlined_call_operand.hbm [shape: f32[2,1024], index: 0, kind: input, shape index: {}]
  %s1 = inlined_call_operand.hbm [shape: f32[2,1024], index: 1, kind: output, shape index: {}]
  %s2 = sld [smem:[#allocation0]]
  $region18: #{tpu_custom_call.1} parent=0
    _
  %s4 = ssub.s32 1, %s2
  %s5 = scalar_select 0, %s4, %s2
  $region1: #{tpu_custom_call.1} parent=0
    #allocation2 [shape = 'u8[8192]{0}', space=vmem, size = 0x2000, scoped, tag = 'input window, operand 0, single buffered']
    #allocation3 [shape = 's32[1]{0}', space=sflag, size = 0x4, scoped, tag = 'scoped memory for tpu_custom_call.1']
    #allocation4 [shape = 's32[1]{0}', space=sflag, size = 0x4, scoped, tag = 'scoped memory for tpu_custom_call.1']
    #allocation5 [shape = 'u8[8192]{0}', space=vmem, size = 0x2000, scoped, tag = 'output window, operand 0, single buffered']
    %6 = vsyncpa [#allocation3], 0
    %7 = vsyncpa [#allocation4], 0
    // Predicated region
    $region2: #{tpu_custom_call.1} parent=1 // pred_check
      _
    $region3: #{tpu_custom_call.1} parent=1 // pred_check_branch
      %9 = sbr.rel (0) target = $region5
    $region4: #{tpu_custom_call.1} parent=1 // pred_region
      %s11 = ssub.s32 256, 256
      %12 = vsyncadd [#allocation3], %s11
      %s14 = sshll.u32 [#allocation2], 4
      %s15 = int_to_ptr.vmem [resolvable:$true] %s14
      %17 = dma.hbm_to_vmem [thread:$0]  %s0, 256, %s15, [#allocation3]
    $region5: #{tpu_custom_call.1} parent=1 // pred_fallthru
      _
    // Predicated region
    $region6: #{tpu_custom_call.1} parent=1 // pred_check
      _
    $region7: #{tpu_custom_call.1} parent=1 // pred_check_branch
      %19 = sbr.rel (0) target = $region9
    $region8: #{tpu_custom_call.1} parent=1 // pred_region
      %20 = dma.done [#allocation3], 256
    $region9: #{tpu_custom_call.1} parent=1 // pred_fallthru
      _
    %v21 = vld [vmem:[#allocation2] sm:$0xff]
    %v22 = vld [vmem:[#allocation2 + $0x8] sm:$0xff]
    %v23 = vmul.f32 %v21, 0.5
    %v24 = vmul.f32 %v22, 0.5
    %v25 = vtanh.pop %v23
    %v26 = vtanh.pop %v24
    %v27 = vadd.f32 %v25, 1.0
    %v28 = vadd.f32 %v26, 1.0
    %v29 = vmul.f32 %v23, %v27
    %v30 = vmul.f32 %v24, %v28
    %31 = vst [vmem:[#allocation5] sm:$0xff] %v29
    %32 = vst [vmem:[#allocation5 + $0x8] sm:$0xff] %v30
    // Predicated region
    $region10: #{tpu_custom_call.1} parent=1 // pred_check
      _
    $region11: #{tpu_custom_call.1} parent=1 // pred_check_branch
      %34 = sbr.rel (0) target = $region13
    $region12: #{tpu_custom_call.1} parent=1 // pred_region
      %s36 = ssub.s32 256, 256
      %37 = vsyncadd [#allocation4], %s36
      %s39 = sshll.u32 [#allocation5], 4
      %s40 = int_to_ptr.vmem [resolvable:$true] %s39
      %42 = dma.vmem_to_hbm [thread:$0]  %s40, 256, %s1, [#allocation4]
    $region13: #{tpu_custom_call.1} parent=1 // pred_fallthru
      _
    // Predicated region
    $region14: #{tpu_custom_call.1} parent=1 // pred_check
      _
    $region15: #{tpu_custom_call.1} parent=1 // pred_check_branch
      %44 = sbr.rel (0) target = $region17
    $region16: #{tpu_custom_call.1} parent=1 // pred_region
      %45 = dma.done [#allocation4], 256
    $region17: #{tpu_custom_call.1} parent=1 // pred_fallthru
      _
    %46 = vsyncpa [#allocation3], 1
    %47 = vsyncpa [#allocation4], 1

</llo_original>
